<compile_context>
chip_gen: v6e
topology: v6e:2x2x1
jax: 0.10.0
libtpu: 0.0.40
codegen_flags: <defaults>
</compile_context>

<pallas_src>
import jax
import jax.numpy as jnp
from jax.experimental import pallas as pl
from jax.experimental.pallas import tpu as pltpu

N_NODES = 40          # final .view(1600) with out_channels=40 -> 40 nodes
IN_CH = 40
HID_CH = 40
OUT_CH = 40
K_HOPS = 3            # TAGConv default K


# ----------------------------- kernel ---------------------------------------

def _tag_layer_t(h_t, a_t, wcat_t, b_t):
    """One TAGConv layer in transposed (channels, nodes) layout.

    h_t    : (C_in, N)              current features, transposed
    a_t    : (N, N)                 A^T (normalized adjacency, transposed)
    wcat_t : (C_out, (K+1)*C_in)    [W_0^T | W_1^T | ... | W_K^T]
    b_t    : (C_out, N)             bias pre-broadcast along nodes
    returns: (C_out, N)             = (sum_k (A^k h) W_k + b)^T
    """
    hops = [h_t]
    for _ in range(K_HOPS):
        # (A h)^T = h^T A^T  -> hop propagation stays a plain matmul.
        hops.append(jnp.dot(hops[-1], a_t, preferred_element_type=jnp.float32))
    # Stack hops along sublanes (offsets are multiples of 8 -> free concat).
    h_stack = jnp.concatenate(hops, axis=0)                 # ((K+1)*C_in, N)
    out = jnp.dot(wcat_t, h_stack, preferred_element_type=jnp.float32)
    return out + b_t


def tagconv_encoder_kernel(a_ref, w1_ref, b1_ref, w2_ref, b2_ref, x_ref, o_ref):
    a_t = a_ref[...]                  # (N, N), resident
    x_t = x_ref[...]                  # (IN_CH, N), batch dim squeezed

    h1 = _tag_layer_t(x_t, a_t, w1_ref[...], b1_ref[...])
    h1 = jnp.maximum(h1, 0.0)         # F.relu
    h2 = _tag_layer_t(h1, a_t, w2_ref[...], b2_ref[...])

    o_ref[...] = h2.astype(o_ref.dtype)


# ----------------------------- wrapper ---------------------------------------

def build_norm_adj(edge_index, num_nodes):
    """Dense gcn_norm adjacency (no self loops), matching PyG TAGConv.

    out[i] = sum_{edges (j -> i)} deg^-1/2[i] * deg^-1/2[j] * x[j].
    Built ONCE per graph topology (cached outside the forward pass).
    """
    row, col = edge_index[0], edge_index[1]
    ew = jnp.ones(row.shape[0], dtype=jnp.float32)
    deg = jnp.zeros((num_nodes,), jnp.float32).at[col].add(ew)
    dinv = jnp.where(deg > 0, 1.0 / jnp.sqrt(deg), 0.0)
    norm = dinv[row] * ew * dinv[col]
    adj = jnp.zeros((num_nodes, num_nodes), jnp.float32).at[col, row].add(norm)
    return adj


def prepare_tag_params(w, b):
    """(K+1, C_in, C_out) weights + (1, C_out) bias -> kernel layout.

    Returns W_cat^T of shape (C_out, (K+1)*C_in) with
    W_cat^T[o, k*C_in + c] = W_k[c, o], and the bias pre-broadcast to
    (C_out, N_NODES).  One-time layout plumbing.
    """
    kp1, cin, cout = w.shape
    wcat_t = jnp.transpose(w.astype(jnp.float32), (2, 0, 1)).reshape(cout, kp1 * cin)
    b_t = jnp.broadcast_to(jnp.asarray(b, jnp.float32).reshape(cout, 1),
                           (cout, N_NODES))
    return wcat_t, b_t


@jax.jit
def tagconv_encoder_batched(x, a_t, w1c, b1c, w2c, b2c):
    """Batched forward.  x: (B, N, C_in) -> (B, N*C_out)."""
    bsz = x.shape[0]
    x_t = jnp.transpose(x.astype(jnp.float32), (0, 2, 1))    # (B, C_in, N)

    const2 = lambda b: (0, 0)     # resident operands: same block every step
    out_t = pl.pallas_call(
        tagconv_encoder_kernel,
        out_shape=jax.ShapeDtypeStruct((bsz, OUT_CH, N_NODES), jnp.float32),
        grid=(bsz,),
        in_specs=[
            pl.BlockSpec((N_NODES, N_NODES), const2),                  # A^T
            pl.BlockSpec((HID_CH, (K_HOPS + 1) * IN_CH), const2),      # W1_cat^T
            pl.BlockSpec((HID_CH, N_NODES), const2),                   # b1
            pl.BlockSpec((OUT_CH, (K_HOPS + 1) * HID_CH), const2),     # W2_cat^T
            pl.BlockSpec((OUT_CH, N_NODES), const2),                   # b2
            pl.BlockSpec((None, IN_CH, N_NODES), lambda b: (b, 0, 0)),  # x^T (streamed)
        ],
        out_specs=pl.BlockSpec((None, OUT_CH, N_NODES), lambda b: (b, 0, 0)),
        compiler_params=pltpu.CompilerParams(
            dimension_semantics=("parallel",)),
    )(a_t, w1c, b1c, w2c, b2c, x_t)

    # Back to node-major and flatten -> per-graph x.view(1600).
    return jnp.transpose(out_t, (0, 2, 1)).reshape(bsz, N_NODES * OUT_CH)


def tagconv_encoder(x, a_t, w1c, b1c, w2c, b2c):
    """Single-graph forward matching TAGConvEncoder.forward -> (1600,)."""
    return tagconv_encoder_batched(x[None], a_t, w1c, b1c, w2c, b2c)[0]


# ----------------------------- demo / check ----------------------------------

if __name__ == "__main__":
    key = jax.random.PRNGKey(0)
    kx, kw1, kb1, kw2, kb2 = jax.random.split(key, 5)

    BATCH = 8
    xb = jax.random.normal(kx, (BATCH, N_NODES, IN_CH), dtype=jnp.float32)

    # Deterministic, NON-symmetric graph: bidirectional ring + one-way chords
    # (asymmetry makes the test sensitive to A-vs-A^T mistakes).
    src = jnp.arange(N_NODES, dtype=jnp.int32)
    dst = (src + 1) % N_NODES
    chord_dst = (src * 7 + 3) % N_NODES
    edge_index = jnp.stack(
        [jnp.concatenate([src, dst, src]),
         jnp.concatenate([dst, src, chord_dst])], axis=0)   # (2, 120)

    # Synthetic TAGConv params: (K+1) bias-free linears + one bias per layer.
    scale1 = 1.0 / jnp.sqrt(jnp.float32(IN_CH))
    scale2 = 1.0 / jnp.sqrt(jnp.float32(HID_CH))
    w1 = jax.random.normal(kw1, (K_HOPS + 1, IN_CH, HID_CH), jnp.float32) * scale1
    b1 = jax.random.normal(kb1, (1, HID_CH), jnp.float32) * 0.1
    w2 = jax.random.normal(kw2, (K_HOPS + 1, HID_CH, OUT_CH), jnp.float32) * scale2
    b2 = jax.random.normal(kb2, (1, OUT_CH), jnp.float32) * 0.1

    # ---- One-time (cached) preprocessing: adjacency + flattened weights. ----
    adj = build_norm_adj(edge_index, N_NODES)   # built once, NOT per forward
    a_t = adj.T                                  # kernel uses A^T
    w1c, b1c = prepare_tag_params(w1, b1)
    w2c, b2c = prepare_tag_params(w2, b2)

    # Batched forward: one pallas_call covers all BATCH graphs.
    out_b = tagconv_encoder_batched(xb, a_t, w1c, b1c, w2c, b2c)
    jax.block_until_ready(out_b)
    assert out_b.shape == (BATCH, N_NODES * OUT_CH)

    # Single-graph forward matching the PyTorch module's .view(1600).
    out_single = tagconv_encoder(xb[0], a_t, w1c, b1c, w2c, b2c)
    jax.block_until_ready(out_single)
    assert out_single.shape == (N_NODES * OUT_CH,)

    # Pure-JAX reference of the same math (natural node-major layout).
    def ref_layer(h, w, b):
        o = h @ w[0]
        z = h
        for k in range(1, K_HOPS + 1):
            z = adj @ z
            o = o + z @ w[k]
        return o + b

    def ref_forward(xg):
        return ref_layer(jnp.maximum(ref_layer(xg, w1, b1), 0.0), w2, b2).reshape(-1)

    ref_b = jax.vmap(ref_forward)(xb)
    assert jnp.allclose(out_b, ref_b, atol=1e-4, rtol=1e-4)
    assert jnp.allclose(out_single, ref_b[0], atol=1e-4, rtol=1e-4)

    print("KERNEL_OK")
</pallas_src>

<mosaic_0001>
module attributes {stable_mosaic.version = 11 : i64} {
  func.func @tagconv_encoder_kernel(%arg0: i32, %arg1: memref<40x40xf32, #tpu.memory_space<vmem>>, %arg2: memref<40x160xf32, #tpu.memory_space<vmem>>, %arg3: memref<40x40xf32, #tpu.memory_space<vmem>>, %arg4: memref<40x160xf32, #tpu.memory_space<vmem>>, %arg5: memref<40x40xf32, #tpu.memory_space<vmem>>, %arg6: memref<1x40x40xf32, #tpu.memory_space<vmem>>, %arg7: memref<1x40x40xf32, #tpu.memory_space<vmem>>) attributes {dimension_semantics = [#tpu.dimension_semantics<parallel>], iteration_bounds = array<i64: 8>, scalar_prefetch = 0 : i64, scratch_operands = 0 : i64, tpu.core_type = #tpu.core_type<tc>, window_params = [{pipeline_mode = #tpu.pipeline_mode<synchronous>, transform_indices = @transform_0, window_bounds = array<i64: 40, 40>}, {pipeline_mode = #tpu.pipeline_mode<synchronous>, transform_indices = @transform_1, window_bounds = array<i64: 40, 160>}, {pipeline_mode = #tpu.pipeline_mode<synchronous>, transform_indices = @transform_2, window_bounds = array<i64: 40, 40>}, {pipeline_mode = #tpu.pipeline_mode<synchronous>, transform_indices = @transform_3, window_bounds = array<i64: 40, 160>}, {pipeline_mode = #tpu.pipeline_mode<synchronous>, transform_indices = @transform_4, window_bounds = array<i64: 40, 40>}, {transform_indices = @transform_5, window_bounds = array<i64: 1, 40, 40>}, {transform_indices = @transform_6, window_bounds = array<i64: 1, 40, 40>}]} {
    %c0 = arith.constant 0 : index
    %c0_0 = arith.constant 0 : index
    %0 = vector.load %arg1[%c0, %c0_0] : memref<40x40xf32, #tpu.memory_space<vmem>>, vector<40x40xf32>
    %c0_1 = arith.constant 0 : index
    %c0_2 = arith.constant 0 : index
    %c0_3 = arith.constant 0 : index
    %1 = vector.load %arg6[%c0_1, %c0_2, %c0_3] : memref<1x40x40xf32, #tpu.memory_space<vmem>>, vector<1x40x40xf32>
    %2 = vector.shape_cast %1 : vector<1x40x40xf32> to vector<40x40xf32>
    %c0_4 = arith.constant 0 : index
    %c0_5 = arith.constant 0 : index
    %3 = vector.load %arg2[%c0_4, %c0_5] : memref<40x160xf32, #tpu.memory_space<vmem>>, vector<40x160xf32>
    %c0_6 = arith.constant 0 : index
    %c0_7 = arith.constant 0 : index
    %4 = vector.load %arg3[%c0_6, %c0_7] : memref<40x40xf32, #tpu.memory_space<vmem>>, vector<40x40xf32>
    %cst = arith.constant dense<0.000000e+00> : vector<40x40xf32>
    %5 = tpu.matmul %2, %0, %cst {dimension_numbers = #tpu.dot_dimension_numbers<[1], [0], [0], [1], [0, 0, 1, 1], [], []>} : vector<40x40xf32>, vector<40x40xf32>, vector<40x40xf32> -> vector<40x40xf32>
    %cst_8 = arith.constant dense<0.000000e+00> : vector<40x40xf32>
    %6 = tpu.matmul %5, %0, %cst_8 {dimension_numbers = #tpu.dot_dimension_numbers<[1], [0], [0], [1], [0, 0, 1, 1], [], []>} : vector<40x40xf32>, vector<40x40xf32>, vector<40x40xf32> -> vector<40x40xf32>
    %cst_9 = arith.constant dense<0.000000e+00> : vector<40x40xf32>
    %7 = tpu.matmul %6, %0, %cst_9 {dimension_numbers = #tpu.dot_dimension_numbers<[1], [0], [0], [1], [0, 0, 1, 1], [], []>} : vector<40x40xf32>, vector<40x40xf32>, vector<40x40xf32> -> vector<40x40xf32>
    %8 = tpu.concatenate %2, %5, %6, %7 in 0 : vector<40x40xf32>, vector<40x40xf32>, vector<40x40xf32>, vector<40x40xf32> -> vector<160x40xf32>
    %cst_10 = arith.constant dense<0.000000e+00> : vector<40x40xf32>
    %9 = tpu.matmul %3, %8, %cst_10 {dimension_numbers = #tpu.dot_dimension_numbers<[1], [0], [0], [1], [0, 0, 1, 1], [], []>} : vector<40x160xf32>, vector<160x40xf32>, vector<40x40xf32> -> vector<40x40xf32>
    %10 = arith.addf %9, %4 : vector<40x40xf32>
    %cst_11 = arith.constant 0.000000e+00 : f32
    %11 = vector.broadcast %cst_11 : f32 to vector<40x40xf32>
    %12 = arith.maximumf %10, %11 : vector<40x40xf32>
    %c0_12 = arith.constant 0 : index
    %c0_13 = arith.constant 0 : index
    %13 = vector.load %arg4[%c0_12, %c0_13] : memref<40x160xf32, #tpu.memory_space<vmem>>, vector<40x160xf32>
    %c0_14 = arith.constant 0 : index
    %c0_15 = arith.constant 0 : index
    %14 = vector.load %arg5[%c0_14, %c0_15] : memref<40x40xf32, #tpu.memory_space<vmem>>, vector<40x40xf32>
    %cst_16 = arith.constant dense<0.000000e+00> : vector<40x40xf32>
    %15 = tpu.matmul %12, %0, %cst_16 {dimension_numbers = #tpu.dot_dimension_numbers<[1], [0], [0], [1], [0, 0, 1, 1], [], []>} : vector<40x40xf32>, vector<40x40xf32>, vector<40x40xf32> -> vector<40x40xf32>
    %cst_17 = arith.constant dense<0.000000e+00> : vector<40x40xf32>
    %16 = tpu.matmul %15, %0, %cst_17 {dimension_numbers = #tpu.dot_dimension_numbers<[1], [0], [0], [1], [0, 0, 1, 1], [], []>} : vector<40x40xf32>, vector<40x40xf32>, vector<40x40xf32> -> vector<40x40xf32>
    %cst_18 = arith.constant dense<0.000000e+00> : vector<40x40xf32>
    %17 = tpu.matmul %16, %0, %cst_18 {dimension_numbers = #tpu.dot_dimension_numbers<[1], [0], [0], [1], [0, 0, 1, 1], [], []>} : vector<40x40xf32>, vector<40x40xf32>, vector<40x40xf32> -> vector<40x40xf32>
    %18 = tpu.concatenate %12, %15, %16, %17 in 0 : vector<40x40xf32>, vector<40x40xf32>, vector<40x40xf32>, vector<40x40xf32> -> vector<160x40xf32>
    %cst_19 = arith.constant dense<0.000000e+00> : vector<40x40xf32>
    %19 = tpu.matmul %13, %18, %cst_19 {dimension_numbers = #tpu.dot_dimension_numbers<[1], [0], [0], [1], [0, 0, 1, 1], [], []>} : vector<40x160xf32>, vector<160x40xf32>, vector<40x40xf32> -> vector<40x40xf32>
    %20 = arith.addf %19, %14 : vector<40x40xf32>
    %c0_20 = arith.constant 0 : index
    %c0_21 = arith.constant 0 : index
    %c0_22 = arith.constant 0 : index
    %21 = vector.load %arg7[%c0_20, %c0_21, %c0_22] : memref<1x40x40xf32, #tpu.memory_space<vmem>>, vector<1x40x40xf32>
    %22 = vector.shape_cast %21 : vector<1x40x40xf32> to vector<40x40xf32>
    %23 = vector.shape_cast %20 : vector<40x40xf32> to vector<1x40x40xf32>
    tpu.vector_store %arg7[%c0_20, %c0_21, %c0_22], %23 {strides = array<i32>} : memref<1x40x40xf32, #tpu.memory_space<vmem>>, vector<1x40x40xf32>,
    return
  }
  func.func @transform_0(%arg0: i32) -> (i32, i32) {
    %c0_i32 = arith.constant 0 : i32
    %c0_i32_0 = arith.constant 0 : i32
    %c0_i32_1 = arith.constant 0 : i32
    return %c0_i32, %c0_i32_0 : i32, i32
  }
  func.func @transform_1(%arg0: i32) -> (i32, i32) {
    %c0_i32 = arith.constant 0 : i32
    %c0_i32_0 = arith.constant 0 : i32
    %c0_i32_1 = arith.constant 0 : i32
    return %c0_i32, %c0_i32_0 : i32, i32
  }
  func.func @transform_2(%arg0: i32) -> (i32, i32) {
    %c0_i32 = arith.constant 0 : i32
    %c0_i32_0 = arith.constant 0 : i32
    %c0_i32_1 = arith.constant 0 : i32
    return %c0_i32, %c0_i32_0 : i32, i32
  }
  func.func @transform_3(%arg0: i32) -> (i32, i32) {
    %c0_i32 = arith.constant 0 : i32
    %c0_i32_0 = arith.constant 0 : i32
    %c0_i32_1 = arith.constant 0 : i32
    return %c0_i32, %c0_i32_0 : i32, i32
  }
  func.func @transform_4(%arg0: i32) -> (i32, i32) {
    %c0_i32 = arith.constant 0 : i32
    %c0_i32_0 = arith.constant 0 : i32
    %c0_i32_1 = arith.constant 0 : i32
    return %c0_i32, %c0_i32_0 : i32, i32
  }
  func.func @transform_5(%arg0: i32) -> (i32, i32, i32) {
    %c0_i32 = arith.constant 0 : i32
    %c0_i32_0 = arith.constant 0 : i32
    %c0_i32_1 = arith.constant 0 : i32
    return %arg0, %c0_i32, %c0_i32_0 : i32, i32, i32
  }
  func.func @transform_6(%arg0: i32) -> (i32, i32, i32) {
    %c0_i32 = arith.constant 0 : i32
    %c0_i32_0 = arith.constant 0 : i32
    %c0_i32_1 = arith.constant 0 : i32
    return %arg0, %c0_i32, %c0_i32_0 : i32, i32, i32
  }
}

</mosaic_0001>

<llo_original>
// kernel: tagconv_encoder_batched.1
$region0: #{tagconv_encoder_batched.1}
  #allocation0 [shape = 'u32[]', space=smem, size = 0x4, offset = 0x4, fixed_abs, tag = 'smem constant byte address 0x4 - core index']
  #allocation1 [shape = 'u32[144,128]{1,0:T(1,128)}', space=vmem, size = 0x12000, scoped, tag = 'internal scratch']
  %s0 = inlined_call_operand.vmem [shape: f32[40,40], index: 0, kind: input, shape index: {}]
  %s1 = inlined_call_operand.vmem [shape: f32[40,160], index: 1, kind: input, shape index: {}]
  %s2 = inlined_call_operand.vmem [shape: f32[40,40], index: 2, kind: input, shape index: {}]
  %s3 = inlined_call_operand.vmem [shape: f32[40,160], index: 3, kind: input, shape index: {}]
  %s4 = inlined_call_operand.vmem [shape: f32[40,40], index: 4, kind: input, shape index: {}]
  %s5 = inlined_call_operand.vmem [shape: f32[8,40,40], index: 5, kind: input, shape index: {}]
  %s6 = inlined_call_operand.vmem [shape: f32[8,40,40], index: 6, kind: output, shape index: {}]
  %s7 = sld [smem:[#allocation0]]
  $region57: #{tagconv_encoder_batched.1} parent=0
    _
  %s9 = ssub.s32 1, %s7
  %s10 = scalar_select 0, %s9, %s7
  loop: start=0, step=1, limit=10
  $region2: #{tagconv_encoder_batched.1} parent=0 // loop_pre_header
    _
  $region3: #{tagconv_encoder_batched.1} parent=0 // loop_header
    %s12 = sphi 0, %s16
    %p13 = scmp.ge.s32.totalorder %s12, 10
    %s20 = sphi 0, %s20
    %s22 = sphi 0, %s20
    %s23 = sphi 0, %s22
    %s37 = sphi 0, %s23
    %s41 = sphi 0, %s41
    %s43 = sphi 0, %s41
    %s44 = sphi 0, %s43
    %s58 = sphi 0, %s44
    %s62 = sphi 0, %s62
    %s64 = sphi 0, %s62
    %s65 = sphi 0, %s64
    %s79 = sphi 0, %s65
    %s83 = sphi 0, %s83
    %s85 = sphi 0, %s83
    %s86 = sphi 0, %s85
    %s100 = sphi 0, %s86
    %s104 = sphi 0, %s104
    %s106 = sphi 0, %s104
    %s107 = sphi 0, %s106
    %s121 = sphi 0, %s107
    %s127 = sphi 0, %s129
    %s130 = sphi 0, %s127
    %s131 = sphi 0, %s130
    %s147 = sphi 0, %s131
    %s153 = sphi 0, %s155
    %s156 = sphi 0, %s153
    %s157 = sphi 0, %s156
    %s173 = sphi 0, %s157
  $region4: #{tagconv_encoder_batched.1} parent=0 // loop_header_branch
    %15 = sbr.rel (%p13) target = $region8
  $region5: #{tagconv_encoder_batched.1} parent=0 // loop_body
    %s17 = ssub.s32 %s12, 1
    %s18 = ssub.s32 %s12, 2
    %s19 = sadd.s32 %s12, 1
    %s21 = sadd.s32 %s20, 1
    %p24 = scmp.eq.s32.totalorder %s12, 7
    %p25 = scmp.ne.s32.totalorder %s20, %s22
    %p26 = scmp.eq.s32.totalorder %s12, 0
    %p27 = por %p25, %p26
    %p28 = scmp.ne.s32.totalorder %s20, %s22
    %p29 = scmp.eq.s32.totalorder %s17, 7
    %p30 = por %p28, %p29
    %p31 = scmp.ne.s32.totalorder %s22, %s23
    %p32 = scmp.eq.s32.totalorder %s17, 0
    %p33 = por %p31, %p32
    %p34 = scmp.ne.s32.totalorder %s22, %s23
    %p35 = scmp.eq.s32.totalorder %s18, 7
    %p36 = por %p34, %p35
    %p38 = scmp.ne.s32.totalorder %s23, %s37
    %p39 = scmp.eq.s32.totalorder %s18, 0
    %p40 = por %p38, %p39
    %s42 = sadd.s32 %s41, 1
    %p45 = scmp.eq.s32.totalorder %s12, 7
    %p46 = scmp.ne.s32.totalorder %s41, %s43
    %p47 = scmp.eq.s32.totalorder %s12, 0
    %p48 = por %p46, %p47
    %p49 = scmp.ne.s32.totalorder %s41, %s43
    %p50 = scmp.eq.s32.totalorder %s17, 7
    %p51 = por %p49, %p50
    %p52 = scmp.ne.s32.totalorder %s43, %s44
    %p53 = scmp.eq.s32.totalorder %s17, 0
    %p54 = por %p52, %p53
    %p55 = scmp.ne.s32.totalorder %s43, %s44
    %p56 = scmp.eq.s32.totalorder %s18, 7
    %p57 = por %p55, %p56
    %p59 = scmp.ne.s32.totalorder %s44, %s58
    %p60 = scmp.eq.s32.totalorder %s18, 0
    %p61 = por %p59, %p60
    %s63 = sadd.s32 %s62, 1
    %p66 = scmp.eq.s32.totalorder %s12, 7
    %p67 = scmp.ne.s32.totalorder %s62, %s64
    %p68 = scmp.eq.s32.totalorder %s12, 0
    %p69 = por %p67, %p68
    %p70 = scmp.ne.s32.totalorder %s62, %s64
    %p71 = scmp.eq.s32.totalorder %s17, 7
    %p72 = por %p70, %p71
    %p73 = scmp.ne.s32.totalorder %s64, %s65
    %p74 = scmp.eq.s32.totalorder %s17, 0
    %p75 = por %p73, %p74
    %p76 = scmp.ne.s32.totalorder %s64, %s65
    %p77 = scmp.eq.s32.totalorder %s18, 7
    %p78 = por %p76, %p77
    %p80 = scmp.ne.s32.totalorder %s65, %s79
    %p81 = scmp.eq.s32.totalorder %s18, 0
    %p82 = por %p80, %p81
    %s84 = sadd.s32 %s83, 1
    %p87 = scmp.eq.s32.totalorder %s12, 7
    %p88 = scmp.ne.s32.totalorder %s83, %s85
    %p89 = scmp.eq.s32.totalorder %s12, 0
    %p90 = por %p88, %p89
    %p91 = scmp.ne.s32.totalorder %s83, %s85
    %p92 = scmp.eq.s32.totalorder %s17, 7
    %p93 = por %p91, %p92
    %p94 = scmp.ne.s32.totalorder %s85, %s86
    %p95 = scmp.eq.s32.totalorder %s17, 0
    %p96 = por %p94, %p95
    %p97 = scmp.ne.s32.totalorder %s85, %s86
    %p98 = scmp.eq.s32.totalorder %s18, 7
    %p99 = por %p97, %p98
    %p101 = scmp.ne.s32.totalorder %s86, %s100
    %p102 = scmp.eq.s32.totalorder %s18, 0
    %p103 = por %p101, %p102
    %s105 = sadd.s32 %s104, 1
    %p108 = scmp.eq.s32.totalorder %s12, 7
    %p109 = scmp.ne.s32.totalorder %s104, %s106
    %p110 = scmp.eq.s32.totalorder %s12, 0
    %p111 = por %p109, %p110
    %p112 = scmp.ne.s32.totalorder %s104, %s106
    %p113 = scmp.eq.s32.totalorder %s17, 7
    %p114 = por %p112, %p113
    %p115 = scmp.ne.s32.totalorder %s106, %s107
    %p116 = scmp.eq.s32.totalorder %s17, 0
    %p117 = por %p115, %p116
    %p118 = scmp.ne.s32.totalorder %s106, %s107
    %p119 = scmp.eq.s32.totalorder %s18, 7
    %p120 = por %p118, %p119
    %p122 = scmp.ne.s32.totalorder %s107, %s121
    %p123 = scmp.eq.s32.totalorder %s18, 0
    %p124 = por %p122, %p123
    %s125 = ssub.s32 %s12, %s19
    %p126 = scmp.eq.s32.totalorder %s125, 0
    %s128 = sadd.s32 %s127, 1
    %s129 = scalar_select %p126, %s127, %s128
    %p132 = pneg %p126
    %p133 = scmp.eq.s32.totalorder %s12, 7
    %p134 = por %p132, %p133
    %p135 = scmp.ne.s32.totalorder %s127, %s130
    %p136 = scmp.eq.s32.totalorder %s12, 0
    %p137 = por %p135, %p136
    %p138 = scmp.ne.s32.totalorder %s127, %s130
    %p139 = scmp.eq.s32.totalorder %s17, 7
    %p140 = por %p138, %p139
    %p141 = scmp.ne.s32.totalorder %s130, %s131
    %p142 = scmp.eq.s32.totalorder %s17, 0
    %p143 = por %p141, %p142
    %p144 = scmp.ne.s32.totalorder %s130, %s131
    %p145 = scmp.eq.s32.totalorder %s18, 7
    %p146 = por %p144, %p145
    %p148 = scmp.ne.s32.totalorder %s131, %s147
    %p149 = scmp.eq.s32.totalorder %s18, 0
    %p150 = por %p148, %p149
    %s151 = ssub.s32 %s12, %s19
    %p152 = scmp.eq.s32.totalorder %s151, 0
    %s154 = sadd.s32 %s153, 1
    %s155 = scalar_select %p152, %s153, %s154
    %p158 = pneg %p152
    %p159 = scmp.eq.s32.totalorder %s12, 7
    %p160 = por %p158, %p159
    %p161 = scmp.ne.s32.totalorder %s153, %s156
    %p162 = scmp.eq.s32.totalorder %s12, 0
    %p163 = por %p161, %p162
    %p164 = scmp.ne.s32.totalorder %s153, %s156
    %p165 = scmp.eq.s32.totalorder %s17, 7
    %p166 = por %p164, %p165
    %p167 = scmp.ne.s32.totalorder %s156, %s157
    %p168 = scmp.eq.s32.totalorder %s17, 0
    %p169 = por %p167, %p168
    %p170 = scmp.ne.s32.totalorder %s156, %s157
    %p171 = scmp.eq.s32.totalorder %s18, 7
    %p172 = por %p170, %p171
    %p174 = scmp.ne.s32.totalorder %s157, %s173
    %p175 = scmp.eq.s32.totalorder %s18, 0
    %p176 = por %p174, %p175
    %p177 = scmp.le.s32.totalorder 1, %s12
    %p178 = scmp.lt.s32.totalorder %s12, 9
    %p179 = pnand %p177, %p178
    %p180 = pneg %p179
    // Predicated region
    $region9: #{tagconv_encoder_batched.1} parent=5 // pred_check
      _
    $region10: #{tagconv_encoder_batched.1} parent=5 // pred_check_branch
      %182 = sbr.rel (%p179) target = $region12
    $region11: #{tagconv_encoder_batched.1} parent=5 // pred_region
      %s183 = ssub.s32 %s12, 1
      // Predicated region
      $region13: #{tagconv_encoder_batched.1} parent=11 // pred_check
        %p184 = pneg %p33
      $region14: #{tagconv_encoder_batched.1} parent=11 // pred_check_branch
        %186 = sbr.rel (%p184) target = $region16
      $region15: #{tagconv_encoder_batched.1} parent=11 // pred_region
        _
      $region16: #{tagconv_encoder_batched.1} parent=11 // pred_fallthru
        _
      // Predicated region
      $region17: #{tagconv_encoder_batched.1} parent=11 // pred_check
        %p187 = pneg %p54
      $region18: #{tagconv_encoder_batched.1} parent=11 // pred_check_branch
        %189 = sbr.rel (%p187) target = $region20
      $region19: #{tagconv_encoder_batched.1} parent=11 // pred_region
        _
      $region20: #{tagconv_encoder_batched.1} parent=11 // pred_fallthru
        _
      // Predicated region
      $region21: #{tagconv_encoder_batched.1} parent=11 // pred_check
        %p190 = pneg %p75
      $region22: #{tagconv_encoder_batched.1} parent=11 // pred_check_branch
        %192 = sbr.rel (%p190) target = $region24
      $region23: #{tagconv_encoder_batched.1} parent=11 // pred_region
        _
      $region24: #{tagconv_encoder_batched.1} parent=11 // pred_fallthru
        _
      // Predicated region
      $region25: #{tagconv_encoder_batched.1} parent=11 // pred_check
        %p193 = pneg %p96
      $region26: #{tagconv_encoder_batched.1} parent=11 // pred_check_branch
        %195 = sbr.rel (%p193) target = $region28
      $region27: #{tagconv_encoder_batched.1} parent=11 // pred_region
        _
      $region28: #{tagconv_encoder_batched.1} parent=11 // pred_fallthru
        _
      // Predicated region
      $region29: #{tagconv_encoder_batched.1} parent=11 // pred_check
        %p196 = pneg %p117
      $region30: #{tagconv_encoder_batched.1} parent=11 // pred_check_branch
        %198 = sbr.rel (%p196) target = $region32
      $region31: #{tagconv_encoder_batched.1} parent=11 // pred_region
        _
      $region32: #{tagconv_encoder_batched.1} parent=11 // pred_fallthru
        _
    $region12: #{tagconv_encoder_batched.1} parent=5 // pred_fallthru
      _
    %p199 = scmp.lt.s32.totalorder %s12, 8
    // Predicated region
    $region33: #{tagconv_encoder_batched.1} parent=5 // pred_check
      %p200 = pneg %p199
    $region34: #{tagconv_encoder_batched.1} parent=5 // pred_check_branch
      %202 = sbr.rel (%p200) target = $region36
    $region35: #{tagconv_encoder_batched.1} parent=5 // pred_region
      // Predicated region
      $region37: #{tagconv_encoder_batched.1} parent=35 // pred_check
        %p203 = pneg %p137
      $region38: #{tagconv_encoder_batched.1} parent=35 // pred_check_branch
        %205 = sbr.rel (%p203) target = $region40
      $region39: #{tagconv_encoder_batched.1} parent=35 // pred_region
        %p206 = scmp.lt.s32.totalorder %s12, 7
        %s207 = scalar_select %p206, %s12, 7
        %s208 = smul.addr %s207, 5
        %s209 = smul.addr %s208, 8
        %s210 = scalar_lea.vmem %s5, %s209
      $region40: #{tagconv_encoder_batched.1} parent=35 // pred_fallthru
        _
    $region36: #{tagconv_encoder_batched.1} parent=5 // pred_fallthru
      _
    %p211 = scmp.le.s32.totalorder 1, %s12
    %p212 = scmp.lt.s32.totalorder %s12, 9
    %p213 = pnand %p211, %p212
    %p214 = pneg %p213
    // Predicated region
    $region41: #{tagconv_encoder_batched.1} parent=5 // pred_check
      _
    $region42: #{tagconv_encoder_batched.1} parent=5 // pred_check_branch
      %216 = sbr.rel (%p213) target = $region44
    $region43: #{tagconv_encoder_batched.1} parent=5 // pred_region
      %s217 = ssub.s32 %s12, 1
      %p218 = pneg %p33
      %p219 = pneg %p30
      %p220 = pneg %p54
      %p221 = pneg %p51
      %p222 = pneg %p75
      %p223 = pneg %p72
      %p224 = pneg %p96
      %p225 = pneg %p93
      %p226 = pneg %p117
      %p227 = pneg %p114
      %p228 = scmp.lt.s32.totalorder %s17, 7
      %s229 = scalar_select %p228, %s17, 7
      %s230 = smul.addr %s229, 5
      %s231 = smul.addr %s230, 8
      %s232 = scalar_lea.vmem %s5, %s231
      %p233 = pneg %p143
      %p234 = pneg %p140
      %p235 = pneg %p169
      %p236 = pneg %p166
      %p237 = scmp.lt.s32.totalorder %s17, 7
      %s238 = scalar_select %p237, %s17, 7
      %s239 = smul.addr %s238, 5
      %s240 = smul.addr %s239, 8
      %s241 = scalar_lea.vmem %s6, %s240
      %p242 = scmp.lt.s32.totalorder %s17, 7
      %s243 = scalar_select %p242, %s17, 7
      %s244 = smul.addr %s243, 5
      %s245 = smul.addr %s244, 8
      %s246 = scalar_lea.vmem %s5, %s245
      %p247 = scmp.lt.s32.totalorder %s17, 7
      %s248 = scalar_select %p247, %s17, 7
      %s249 = smul.addr %s248, 5
      %s250 = smul.addr %s249, 8
      %s251 = scalar_lea.vmem %s6, %s250
      %v252 = vld [vmem:[%s0] sm:$0xff]
      %v253 = vld [vmem:[%s0 + $0x8] sm:$0xff]
      %v254 = vld [vmem:[%s0 + $0x10] sm:$0xff]
      %v255 = vld [vmem:[%s0 + $0x18] sm:$0xff]
      %v256 = vld [vmem:[%s0 + $0x20] sm:$0xff]
      %v257 = vld [vmem:[%s246] sm:$0xff]
      %v258 = vld [vmem:[%s246 + $0x8] sm:$0xff]
      %v259 = vld [vmem:[%s246 + $0x10] sm:$0xff]
      %v260 = vld [vmem:[%s246 + $0x18] sm:$0xff]
      %v261 = vld [vmem:[%s246 + $0x20] sm:$0xff]
      %v262 = vld [vmem:[%s1] sm:$0xff]
      %v263 = vld [vmem:[%s1 + $0x8] sm:$0xff]
      %v264 = vld [vmem:[%s1 + $0x10] sm:$0xff]
      %v265 = vld [vmem:[%s1 + $0x18] sm:$0xff]
      %v266 = vld [vmem:[%s1 + $0x20] sm:$0xff]
      %v267 = vld [vmem:[%s1 + $0x28] sm:$0xff]
      %v268 = vld [vmem:[%s1 + $0x30] sm:$0xff]
      %v269 = vld [vmem:[%s1 + $0x38] sm:$0xff]
      %v270 = vld [vmem:[%s1 + $0x40] sm:$0xff]
      %v271 = vld [vmem:[%s1 + $0x48] sm:$0xff]
      %v272 = vld [vmem:[%s2] sm:$0xff]
      %v273 = vld [vmem:[%s2 + $0x8] sm:$0xff]
      %v274 = vld [vmem:[%s2 + $0x10] sm:$0xff]
      %v275 = vld [vmem:[%s2 + $0x18] sm:$0xff]
      %v276 = vld [vmem:[%s2 + $0x20] sm:$0xff]
      %vm277 = vcmask 326656
      %v279 = vsel %vm277, %v257, 0
      %v282 = vsel %vm277, %v258, 0
      %v285 = vsel %vm277, %v259, 0
      %v288 = vsel %vm277, %v260, 0
      %v291 = vsel %vm277, %v261, 0
      %293 = vmatprep.subr.mxu0 0.0
      %294 = vmatpush1.msra.mxu0 0.0
      %295 = vmatprep.subr.mxu0 0.0
      %296 = vmatpush1.msra.mxu0 0.0
      %297 = vmatprep.subr.mxu0 0.0
      %298 = vmatpush1.msra.mxu0 0.0
      %299 = vmatprep.subr.mxu0 0.0
      %300 = vmatpush1.msra.mxu0 0.0
      %301 = vmatprep.subr.mxu0 0.0
      %302 = vmatpush1.msra.mxu0 0.0
      %303 = vmatprep.subr.mxu0 0.0
      %304 = vmatpush1.msra.mxu0 0.0
      %305 = vmatprep.subr.mxu0 0.0
      %306 = vmatpush1.msra.mxu0 0.0
      %307 = vmatprep.subr.mxu0 0.0
      %308 = vmatpush1.msra.mxu0 0.0
      %309 = vmatprep.subr.mxu0 0.0
      %310 = vmatpush1.msra.mxu0 0.0
      %311 = vmatprep.subr.mxu0 0.0
      %312 = vmatpush1.msra.mxu0 0.0
      %313 = vmatprep.subr.mxu0 0.0
      %314 = vmatpush1.msra.mxu0 0.0
      %315 = vmatprep.subr.mxu0 0.0
      %316 = vmatpush1.msra.mxu0 %v256
      %317 = vmatprep.subr.mxu0 0.0
      %318 = vmatpush1.msra.mxu0 %v255
      %319 = vmatprep.subr.mxu0 0.0
      %320 = vmatpush1.msra.mxu0 %v254
      %321 = vmatprep.subr.mxu0 0.0
      %322 = vmatpush1.msra.mxu0 %v253
      %323 = vmatprep.subr.mxu0 0.0
      %324 = vmatpush1.msra.mxu0 %v252
      %325 = vmatprep.subr.mxu0 0.0
      %326 = vmatpush2.msra.mxu0 0.0
      %327 = vmatprep.subr.mxu0 0.0
      %328 = vmatpush2.msra.mxu0 0.0
      %329 = vmatprep.subr.mxu0 0.0
      %330 = vmatpush2.msra.mxu0 0.0
      %331 = vmatprep.subr.mxu0 0.0
      %332 = vmatpush2.msra.mxu0 0.0
      %333 = vmatprep.subr.mxu0 0.0
      %334 = vmatpush2.msra.mxu0 0.0
      %335 = vmatprep.subr.mxu0 0.0
      %336 = vmatpush2.msra.mxu0 0.0
      %337 = vmatprep.subr.mxu0 0.0
      %338 = vmatpush2.msra.mxu0 0.0
      %339 = vmatprep.subr.mxu0 0.0
      %340 = vmatpush2.msra.mxu0 0.0
      %341 = vmatprep.subr.mxu0 0.0
      %342 = vmatpush2.msra.mxu0 0.0
      %343 = vmatprep.subr.mxu0 0.0
      %344 = vmatpush2.msra.mxu0 0.0
      %345 = vmatprep.subr.mxu0 0.0
      %346 = vmatpush2.msra.mxu0 0.0
      %347 = vmatprep.subr.mxu0 0.0
      %348 = vmatpush2.msra.mxu0 0.0
      %349 = vmatprep.subr.mxu0 0.0
      %350 = vmatpush2.msra.mxu0 0.0
      %351 = vmatprep.subr.mxu0 0.0
      %352 = vmatpush2.msra.mxu0 0.0
      %353 = vmatprep.subr.mxu0 0.0
      %354 = vmatpush2.msra.mxu0 0.0
      %355 = vmatprep.subr.mxu0 0.0
      %356 = vmatpush2.msra.mxu0 0.0
      %357 = vmatprep.mubr.f32.mxu0 0.0
      %358 = vmatmul.mubr.f32.gmra.mxu0 %v279
      %v359 = vpop.f32.mrf.mxu0
      %v360 = vadd.f32 0.0, %v359
      %v361 = vpop.f32.mrf.mxu0
      %362 = vmatprep.mubr.f32.mxu0 0.0
      %363 = vmatmul.mubr.f32.gmra.mxu0 %v282
      %v364 = vpop.f32.mrf.mxu0
      %v365 = vadd.f32 0.0, %v364
      %v366 = vpop.f32.mrf.mxu0
      %367 = vmatprep.mubr.f32.mxu0 0.0
      %368 = vmatmul.mubr.f32.gmra.mxu0 %v285
      %v369 = vpop.f32.mrf.mxu0
      %v370 = vadd.f32 0.0, %v369
      %v371 = vpop.f32.mrf.mxu0
      %372 = vmatprep.mubr.f32.mxu0 0.0
      %373 = vmatmul.mubr.f32.gmra.mxu0 %v288
      %v374 = vpop.f32.mrf.mxu0
      %v375 = vadd.f32 0.0, %v374
      %v376 = vpop.f32.mrf.mxu0
      %377 = vmatprep.mubr.f32.mxu0 0.0
      %378 = vmatmul.mubr.f32.gmra.mxu0 %v291
      %v379 = vpop.f32.mrf.mxu0
      %v380 = vadd.f32 0.0, %v379
      %v381 = vpop.f32.mrf.mxu0
      %382 = vdwg.mxu0
      %v384 = vsel %vm277, %v360, 0
      %v387 = vsel %vm277, %v365, 0
      %v390 = vsel %vm277, %v370, 0
      %v393 = vsel %vm277, %v375, 0
      %v396 = vsel %vm277, %v380, 0
      %398 = vmatprep.subr.mxu0 0.0
      %399 = vmatpush1.msra.mxu0 0.0
      %400 = vmatprep.subr.mxu0 0.0
      %401 = vmatpush1.msra.mxu0 0.0
      %402 = vmatprep.subr.mxu0 0.0
      %403 = vmatpush1.msra.mxu0 0.0
      %404 = vmatprep.subr.mxu0 0.0
      %405 = vmatpush1.msra.mxu0 0.0
      %406 = vmatprep.subr.mxu0 0.0
      %407 = vmatpush1.msra.mxu0 0.0
      %408 = vmatprep.subr.mxu0 0.0
      %409 = vmatpush1.msra.mxu0 0.0
      %410 = vmatprep.subr.mxu0 0.0
      %411 = vmatpush1.msra.mxu0 0.0
      %412 = vmatprep.subr.mxu0 0.0
      %413 = vmatpush1.msra.mxu0 0.0
      %414 = vmatprep.subr.mxu0 0.0
      %415 = vmatpush1.msra.mxu0 0.0
      %416 = vmatprep.subr.mxu0 0.0
      %417 = vmatpush1.msra.mxu0 0.0
      %418 = vmatprep.subr.mxu0 0.0
      %419 = vmatpush1.msra.mxu0 0.0
      %420 = vmatprep.subr.mxu0 0.0
      %421 = vmatpush1.msra.mxu0 %v256
      %422 = vmatprep.subr.mxu0 0.0
      %423 = vmatpush1.msra.mxu0 %v255
      %424 = vmatprep.subr.mxu0 0.0
      %425 = vmatpush1.msra.mxu0 %v254
      %426 = vmatprep.subr.mxu0 0.0
      %427 = vmatpush1.msra.mxu0 %v253
      %428 = vmatprep.subr.mxu0 0.0
      %429 = vmatpush1.msra.mxu0 %v252
      %430 = vmatprep.subr.mxu0 0.0
      %431 = vmatpush2.msra.mxu0 0.0
      %432 = vmatprep.subr.mxu0 0.0
      %433 = vmatpush2.msra.mxu0 0.0
      %434 = vmatprep.subr.mxu0 0.0
      %435 = vmatpush2.msra.mxu0 0.0
      %436 = vmatprep.subr.mxu0 0.0
      %437 = vmatpush2.msra.mxu0 0.0
      %438 = vmatprep.subr.mxu0 0.0
      %439 = vmatpush2.msra.mxu0 0.0
      %440 = vmatprep.subr.mxu0 0.0
      %441 = vmatpush2.msra.mxu0 0.0
      %442 = vmatprep.subr.mxu0 0.0
      %443 = vmatpush2.msra.mxu0 0.0
      %444 = vmatprep.subr.mxu0 0.0
      %445 = vmatpush2.msra.mxu0 0.0
      %446 = vmatprep.subr.mxu0 0.0
      %447 = vmatpush2.msra.mxu0 0.0
      %448 = vmatprep.subr.mxu0 0.0
      %449 = vmatpush2.msra.mxu0 0.0
      %450 = vmatprep.subr.mxu0 0.0
      %451 = vmatpush2.msra.mxu0 0.0
      %452 = vmatprep.subr.mxu0 0.0
      %453 = vmatpush2.msra.mxu0 0.0
      %454 = vmatprep.subr.mxu0 0.0
      %455 = vmatpush2.msra.mxu0 0.0
      %456 = vmatprep.subr.mxu0 0.0
      %457 = vmatpush2.msra.mxu0 0.0
      %458 = vmatprep.subr.mxu0 0.0
      %459 = vmatpush2.msra.mxu0 0.0
      %460 = vmatprep.subr.mxu0 0.0
      %461 = vmatpush2.msra.mxu0 0.0
      %462 = vmatprep.mubr.f32.mxu0 0.0
      %463 = vmatmul.mubr.f32.gmra.mxu0 %v384
      %v464 = vpop.f32.mrf.mxu0
      %v465 = vadd.f32 0.0, %v464
      %v466 = vpop.f32.mrf.mxu0
      %467 = vmatprep.mubr.f32.mxu0 0.0
      %468 = vmatmul.mubr.f32.gmra.mxu0 %v387
      %v469 = vpop.f32.mrf.mxu0
      %v470 = vadd.f32 0.0, %v469
      %v471 = vpop.f32.mrf.mxu0
      %472 = vmatprep.mubr.f32.mxu0 0.0
      %473 = vmatmul.mubr.f32.gmra.mxu0 %v390
      %v474 = vpop.f32.mrf.mxu0
      %v475 = vadd.f32 0.0, %v474
      %v476 = vpop.f32.mrf.mxu0
      %477 = vmatprep.mubr.f32.mxu0 0.0
      %478 = vmatmul.mubr.f32.gmra.mxu0 %v393
      %v479 = vpop.f32.mrf.mxu0
      %v480 = vadd.f32 0.0, %v479
      %v481 = vpop.f32.mrf.mxu0
      %482 = vmatprep.mubr.f32.mxu0 0.0
      %483 = vmatmul.mubr.f32.gmra.mxu0 %v396
      %v484 = vpop.f32.mrf.mxu0
      %v485 = vadd.f32 0.0, %v484
      %v486 = vpop.f32.mrf.mxu0
      %487 = vdwg.mxu0
      %v489 = vsel %vm277, %v465, 0
      %v492 = vsel %vm277, %v470, 0
      %v495 = vsel %vm277, %v475, 0
      %v498 = vsel %vm277, %v480, 0
      %v501 = vsel %vm277, %v485, 0
      %503 = vmatprep.subr.mxu0 0.0
      %504 = vmatpush1.msra.mxu0 0.0
      %505 = vmatprep.subr.mxu0 0.0
      %506 = vmatpush1.msra.mxu0 0.0
      %507 = vmatprep.subr.mxu0 0.0
      %508 = vmatpush1.msra.mxu0 0.0
      %509 = vmatprep.subr.mxu0 0.0
      %510 = vmatpush1.msra.mxu0 0.0
      %511 = vmatprep.subr.mxu0 0.0
      %512 = vmatpush1.msra.mxu0 0.0
      %513 = vmatprep.subr.mxu0 0.0
      %514 = vmatpush1.msra.mxu0 0.0
      %515 = vmatprep.subr.mxu0 0.0
      %516 = vmatpush1.msra.mxu0 0.0
      %517 = vmatprep.subr.mxu0 0.0
      %518 = vmatpush1.msra.mxu0 0.0
      %519 = vmatprep.subr.mxu0 0.0
      %520 = vmatpush1.msra.mxu0 0.0
      %521 = vmatprep.subr.mxu0 0.0
      %522 = vmatpush1.msra.mxu0 0.0
      %523 = vmatprep.subr.mxu0 0.0
      %524 = vmatpush1.msra.mxu0 0.0
      %525 = vmatprep.subr.mxu0 0.0
      %526 = vmatpush1.msra.mxu0 %v256
      %527 = vmatprep.subr.mxu0 0.0
      %528 = vmatpush1.msra.mxu0 %v255
      %529 = vmatprep.subr.mxu0 0.0
      %530 = vmatpush1.msra.mxu0 %v254
      %531 = vmatprep.subr.mxu0 0.0
      %532 = vmatpush1.msra.mxu0 %v253
      %533 = vmatprep.subr.mxu0 0.0
      %534 = vmatpush1.msra.mxu0 %v252
      %535 = vmatprep.subr.mxu0 0.0
      %536 = vmatpush2.msra.mxu0 0.0
      %537 = vmatprep.subr.mxu0 0.0
      %538 = vmatpush2.msra.mxu0 0.0
      %539 = vmatprep.subr.mxu0 0.0
      %540 = vmatpush2.msra.mxu0 0.0
      %541 = vmatprep.subr.mxu0 0.0
      %542 = vmatpush2.msra.mxu0 0.0
      %543 = vmatprep.subr.mxu0 0.0
      %544 = vmatpush2.msra.mxu0 0.0
      %545 = vmatprep.subr.mxu0 0.0
      %546 = vmatpush2.msra.mxu0 0.0
      %547 = vmatprep.subr.mxu0 0.0
      %548 = vmatpush2.msra.mxu0 0.0
      %549 = vmatprep.subr.mxu0 0.0
      %550 = vmatpush2.msra.mxu0 0.0
      %551 = vmatprep.subr.mxu0 0.0
      %552 = vmatpush2.msra.mxu0 0.0
      %553 = vmatprep.subr.mxu0 0.0
      %554 = vmatpush2.msra.mxu0 0.0
      %555 = vmatprep.subr.mxu0 0.0
      %556 = vmatpush2.msra.mxu0 0.0
      %557 = vmatprep.subr.mxu0 0.0
      %558 = vmatpush2.msra.mxu0 0.0
      %559 = vmatprep.subr.mxu0 0.0
      %560 = vmatpush2.msra.mxu0 0.0
      %561 = vmatprep.subr.mxu0 0.0
      %562 = vmatpush2.msra.mxu0 0.0
      %563 = vmatprep.subr.mxu0 0.0
      %564 = vmatpush2.msra.mxu0 0.0
      %565 = vmatprep.subr.mxu0 0.0
      %566 = vmatpush2.msra.mxu0 0.0
      %567 = vmatprep.mubr.f32.mxu0 0.0
      %568 = vmatmul.mubr.f32.gmra.mxu0 %v489
      %v569 = vpop.f32.mrf.mxu0
      %v570 = vadd.f32 0.0, %v569
      %v571 = vpop.f32.mrf.mxu0
      %572 = vmatprep.mubr.f32.mxu0 0.0
      %573 = vmatmul.mubr.f32.gmra.mxu0 %v492
      %v574 = vpop.f32.mrf.mxu0
      %v575 = vadd.f32 0.0, %v574
      %v576 = vpop.f32.mrf.mxu0
      %577 = vmatprep.mubr.f32.mxu0 0.0
      %578 = vmatmul.mubr.f32.gmra.mxu0 %v495
      %v579 = vpop.f32.mrf.mxu0
      %v580 = vadd.f32 0.0, %v579
      %v581 = vpop.f32.mrf.mxu0
      %582 = vmatprep.mubr.f32.mxu0 0.0
      %583 = vmatmul.mubr.f32.gmra.mxu0 %v498
      %v584 = vpop.f32.mrf.mxu0
      %v585 = vadd.f32 0.0, %v584
      %v586 = vpop.f32.mrf.mxu0
      %587 = vmatprep.mubr.f32.mxu0 0.0
      %588 = vmatmul.mubr.f32.gmra.mxu0 %v501
      %v589 = vpop.f32.mrf.mxu0
      %v590 = vadd.f32 0.0, %v589
      %v591 = vpop.f32.mrf.mxu0
      %592 = vdwg.mxu0
      %vm593 = vcmask 261120
      %v595 = vsel %vm593, %v263, 0
      %v598 = vsel %vm593, %v265, 0
      %v601 = vsel %vm593, %v267, 0
      %v604 = vsel %vm593, %v269, 0
      %v607 = vsel %vm593, %v271, 0
      %609 = vmatprep.subr.mxu0 0.0
      %610 = vmatpush1.msra.mxu0 %v570
      %611 = vmatprep.subr.mxu0 0.0
      %612 = vmatpush1.msra.mxu0 %v485
      %613 = vmatprep.subr.mxu0 0.0
      %614 = vmatpush1.msra.mxu0 %v480
      %615 = vmatprep.subr.mxu0 0.0
      %616 = vmatpush1.msra.mxu0 %v475
      %617 = vmatprep.subr.mxu0 0.0
      %618 = vmatpush1.msra.mxu0 %v470
      %619 = vmatprep.subr.mxu0 0.0
      %620 = vmatpush1.msra.mxu0 %v465
      %621 = vmatprep.subr.mxu0 0.0
      %622 = vmatpush1.msra.mxu0 %v380
      %623 = vmatprep.subr.mxu0 0.0
      %624 = vmatpush1.msra.mxu0 %v375
      %625 = vmatprep.subr.mxu0 0.0
      %626 = vmatpush1.msra.mxu0 %v370
      %627 = vmatprep.subr.mxu0 0.0
      %628 = vmatpush1.msra.mxu0 %v365
      %629 = vmatprep.subr.mxu0 0.0
      %630 = vmatpush1.msra.mxu0 %v360
      %631 = vmatprep.subr.mxu0 0.0
      %632 = vmatpush1.msra.mxu0 %v261
      %633 = vmatprep.subr.mxu0 0.0
      %634 = vmatpush1.msra.mxu0 %v260
      %635 = vmatprep.subr.mxu0 0.0
      %636 = vmatpush1.msra.mxu0 %v259
      %637 = vmatprep.subr.mxu0 0.0
      %638 = vmatpush1.msra.mxu0 %v258
      %639 = vmatprep.subr.mxu0 0.0
      %640 = vmatpush1.msra.mxu0 %v257
      %641 = vmatprep.subr.mxu0 0.0
      %642 = vmatpush2.msra.mxu0 0.0
      %643 = vmatprep.subr.mxu0 0.0
      %644 = vmatpush2.msra.mxu0 0.0
      %645 = vmatprep.subr.mxu0 0.0
      %646 = vmatpush2.msra.mxu0 0.0
      %647 = vmatprep.subr.mxu0 0.0
      %648 = vmatpush2.msra.mxu0 0.0
      %649 = vmatprep.subr.mxu0 0.0
      %650 = vmatpush2.msra.mxu0 0.0
      %651 = vmatprep.subr.mxu0 0.0
      %652 = vmatpush2.msra.mxu0 0.0
      %653 = vmatprep.subr.mxu0 0.0
      %654 = vmatpush2.msra.mxu0 0.0
      %655 = vmatprep.subr.mxu0 0.0
      %656 = vmatpush2.msra.mxu0 0.0
      %657 = vmatprep.subr.mxu0 0.0
      %658 = vmatpush2.msra.mxu0 0.0
      %659 = vmatprep.subr.mxu0 0.0
      %660 = vmatpush2.msra.mxu0 0.0
      %661 = vmatprep.subr.mxu0 0.0
      %662 = vmatpush2.msra.mxu0 0.0
      %663 = vmatprep.subr.mxu0 0.0
      %664 = vmatpush2.msra.mxu0 0.0
      %665 = vmatprep.subr.mxu0 0.0
      %666 = vmatpush2.msra.mxu0 %v590
      %667 = vmatprep.subr.mxu0 0.0
      %668 = vmatpush2.msra.mxu0 %v585
      %669 = vmatprep.subr.mxu0 0.0
      %670 = vmatpush2.msra.mxu0 %v580
      %671 = vmatprep.subr.mxu0 0.0
      %672 = vmatpush2.msra.mxu0 %v575
      %673 = vmatprep.mubr.f32.mxu0 %v595
      %674 = vmatmul.mubr.f32.gmra.mxu0 %v262
      %v675 = vpop.f32.mrf.mxu0
      %v676 = vadd.f32 %v272, %v675
      %v677 = vpop.f32.mrf.mxu0
      %678 = vmatprep.mubr.f32.mxu0 %v598
      %679 = vmatmul.mubr.f32.gmra.mxu0 %v264
      %v680 = vpop.f32.mrf.mxu0
      %v681 = vadd.f32 %v273, %v680
      %v682 = vpop.f32.mrf.mxu0
      %683 = vmatprep.mubr.f32.mxu0 %v601
      %684 = vmatmul.mubr.f32.gmra.mxu0 %v266
      %v685 = vpop.f32.mrf.mxu0
      %v686 = vadd.f32 %v274, %v685
      %v687 = vpop.f32.mrf.mxu0
      %688 = vmatprep.mubr.f32.mxu0 %v604
      %689 = vmatmul.mubr.f32.gmra.mxu0 %v268
      %v690 = vpop.f32.mrf.mxu0
      %v691 = vadd.f32 %v275, %v690
      %v692 = vpop.f32.mrf.mxu0
      %693 = vmatprep.mubr.f32.mxu0 %v607
      %694 = vmatmul.mubr.f32.gmra.mxu0 %v270
      %v695 = vpop.f32.mrf.mxu0
      %v696 = vadd.f32 %v276, %v695
      %v697 = vpop.f32.mrf.mxu0
      %698 = vdwg.mxu0
      %v699 = vmax.f32 %v676, 0.0
      %v700 = vmax.f32 %v681, 0.0
      %v701 = vmax.f32 %v686, 0.0
      %v702 = vmax.f32 %v691, 0.0
      %v703 = vmax.f32 %v696, 0.0
      %v704 = vld [vmem:[%s3] sm:$0xff]
      %v705 = vld [vmem:[%s3 + $0x8] sm:$0xff]
      %v706 = vld [vmem:[%s3 + $0x10] sm:$0xff]
      %v707 = vld [vmem:[%s3 + $0x18] sm:$0xff]
      %v708 = vld [vmem:[%s3 + $0x20] sm:$0xff]
      %v709 = vld [vmem:[%s3 + $0x28] sm:$0xff]
      %v710 = vld [vmem:[%s3 + $0x30] sm:$0xff]
      %v711 = vld [vmem:[%s3 + $0x38] sm:$0xff]
      %v712 = vld [vmem:[%s3 + $0x40] sm:$0xff]
      %v713 = vld [vmem:[%s3 + $0x48] sm:$0xff]
      %v714 = vld [vmem:[%s4] sm:$0xff]
      %v715 = vld [vmem:[%s4 + $0x8] sm:$0xff]
      %v716 = vld [vmem:[%s4 + $0x10] sm:$0xff]
      %v717 = vld [vmem:[%s4 + $0x18] sm:$0xff]
      %v718 = vld [vmem:[%s4 + $0x20] sm:$0xff]
      %v720 = vsel %vm277, %v699, 0
      %v723 = vsel %vm277, %v700, 0
      %v726 = vsel %vm277, %v701, 0
      %v729 = vsel %vm277, %v702, 0
      %v732 = vsel %vm277, %v703, 0
      %734 = vmatprep.subr.mxu0 0.0
      %735 = vmatpush1.msra.mxu0 0.0
      %736 = vmatprep.subr.mxu0 0.0
      %737 = vmatpush1.msra.mxu0 0.0
      %738 = vmatprep.subr.mxu0 0.0
      %739 = vmatpush1.msra.mxu0 0.0
      %740 = vmatprep.subr.mxu0 0.0
      %741 = vmatpush1.msra.mxu0 0.0
      %742 = vmatprep.subr.mxu0 0.0
      %743 = vmatpush1.msra.mxu0 0.0
      %744 = vmatprep.subr.mxu0 0.0
      %745 = vmatpush1.msra.mxu0 0.0
      %746 = vmatprep.subr.mxu0 0.0
      %747 = vmatpush1.msra.mxu0 0.0
      %748 = vmatprep.subr.mxu0 0.0
      %749 = vmatpush1.msra.mxu0 0.0
      %750 = vmatprep.subr.mxu0 0.0
      %751 = vmatpush1.msra.mxu0 0.0
      %752 = vmatprep.subr.mxu0 0.0
      %753 = vmatpush1.msra.mxu0 0.0
      %754 = vmatprep.subr.mxu0 0.0
      %755 = vmatpush1.msra.mxu0 0.0
      %756 = vmatprep.subr.mxu0 0.0
      %757 = vmatpush1.msra.mxu0 %v256
      %758 = vmatprep.subr.mxu0 0.0
      %759 = vmatpush1.msra.mxu0 %v255
      %760 = vmatprep.subr.mxu0 0.0
      %761 = vmatpush1.msra.mxu0 %v254
      %762 = vmatprep.subr.mxu0 0.0
      %763 = vmatpush1.msra.mxu0 %v253
      %764 = vmatprep.subr.mxu0 0.0
      %765 = vmatpush1.msra.mxu0 %v252
      %766 = vmatprep.subr.mxu0 0.0
      %767 = vmatpush2.msra.mxu0 0.0
      %768 = vmatprep.subr.mxu0 0.0
      %769 = vmatpush2.msra.mxu0 0.0
      %770 = vmatprep.subr.mxu0 0.0
      %771 = vmatpush2.msra.mxu0 0.0
      %772 = vmatprep.subr.mxu0 0.0
      %773 = vmatpush2.msra.mxu0 0.0
      %774 = vmatprep.subr.mxu0 0.0
      %775 = vmatpush2.msra.mxu0 0.0
      %776 = vmatprep.subr.mxu0 0.0
      %777 = vmatpush2.msra.mxu0 0.0
      %778 = vmatprep.subr.mxu0 0.0
      %779 = vmatpush2.msra.mxu0 0.0
      %780 = vmatprep.subr.mxu0 0.0
      %781 = vmatpush2.msra.mxu0 0.0
      %782 = vmatprep.subr.mxu0 0.0
      %783 = vmatpush2.msra.mxu0 0.0
      %784 = vmatprep.subr.mxu0 0.0
      %785 = vmatpush2.msra.mxu0 0.0
      %786 = vmatprep.subr.mxu0 0.0
      %787 = vmatpush2.msra.mxu0 0.0
      %788 = vmatprep.subr.mxu0 0.0
      %789 = vmatpush2.msra.mxu0 0.0
      %790 = vmatprep.subr.mxu0 0.0
      %791 = vmatpush2.msra.mxu0 0.0
      %792 = vmatprep.subr.mxu0 0.0
      %793 = vmatpush2.msra.mxu0 0.0
      %794 = vmatprep.subr.mxu0 0.0
      %795 = vmatpush2.msra.mxu0 0.0
      %796 = vmatprep.subr.mxu0 0.0
      %797 = vmatpush2.msra.mxu0 0.0
      %798 = vmatprep.mubr.f32.mxu0 0.0
      %799 = vmatmul.mubr.f32.gmra.mxu0 %v720
      %v800 = vpop.f32.mrf.mxu0
      %v801 = vadd.f32 0.0, %v800
      %v802 = vpop.f32.mrf.mxu0
      %803 = vmatprep.mubr.f32.mxu0 0.0
      %804 = vmatmul.mubr.f32.gmra.mxu0 %v723
      %v805 = vpop.f32.mrf.mxu0
      %v806 = vadd.f32 0.0, %v805
      %v807 = vpop.f32.mrf.mxu0
      %808 = vmatprep.mubr.f32.mxu0 0.0
      %809 = vmatmul.mubr.f32.gmra.mxu0 %v726
      %v810 = vpop.f32.mrf.mxu0
      %v811 = vadd.f32 0.0, %v810
      %v812 = vpop.f32.mrf.mxu0
      %813 = vmatprep.mubr.f32.mxu0 0.0
      %814 = vmatmul.mubr.f32.gmra.mxu0 %v729
      %v815 = vpop.f32.mrf.mxu0
      %v816 = vadd.f32 0.0, %v815
      %v817 = vpop.f32.mrf.mxu0
      %818 = vmatprep.mubr.f32.mxu0 0.0
      %819 = vmatmul.mubr.f32.gmra.mxu0 %v732
      %v820 = vpop.f32.mrf.mxu0
      %v821 = vadd.f32 0.0, %v820
      %v822 = vpop.f32.mrf.mxu0
      %823 = vdwg.mxu0
      %v825 = vsel %vm277, %v801, 0
      %v828 = vsel %vm277, %v806, 0
      %v831 = vsel %vm277, %v811, 0
      %v834 = vsel %vm277, %v816, 0
      %v837 = vsel %vm277, %v821, 0
      %839 = vmatprep.subr.mxu0 0.0
      %840 = vmatpush1.msra.mxu0 0.0
      %841 = vmatprep.subr.mxu0 0.0
      %842 = vmatpush1.msra.mxu0 0.0
      %843 = vmatprep.subr.mxu0 0.0
      %844 = vmatpush1.msra.mxu0 0.0
      %845 = vmatprep.subr.mxu0 0.0
      %846 = vmatpush1.msra.mxu0 0.0
      %847 = vmatprep.subr.mxu0 0.0
      %848 = vmatpush1.msra.mxu0 0.0
      %849 = vmatprep.subr.mxu0 0.0
      %850 = vmatpush1.msra.mxu0 0.0
      %851 = vmatprep.subr.mxu0 0.0
      %852 = vmatpush1.msra.mxu0 0.0
      %853 = vmatprep.subr.mxu0 0.0
      %854 = vmatpush1.msra.mxu0 0.0
      %855 = vmatprep.subr.mxu0 0.0
      %856 = vmatpush1.msra.mxu0 0.0
      %857 = vmatprep.subr.mxu0 0.0
      %858 = vmatpush1.msra.mxu0 0.0
      %859 = vmatprep.subr.mxu0 0.0
      %860 = vmatpush1.msra.mxu0 0.0
      %861 = vmatprep.subr.mxu0 0.0
      %862 = vmatpush1.msra.mxu0 %v256
      %863 = vmatprep.subr.mxu0 0.0
      %864 = vmatpush1.msra.mxu0 %v255
      %865 = vmatprep.subr.mxu0 0.0
      %866 = vmatpush1.msra.mxu0 %v254
      %867 = vmatprep.subr.mxu0 0.0
      %868 = vmatpush1.msra.mxu0 %v253
      %869 = vmatprep.subr.mxu0 0.0
      %870 = vmatpush1.msra.mxu0 %v252
      %871 = vmatprep.subr.mxu0 0.0
      %872 = vmatpush2.msra.mxu0 0.0
      %873 = vmatprep.subr.mxu0 0.0
      %874 = vmatpush2.msra.mxu0 0.0
      %875 = vmatprep.subr.mxu0 0.0
      %876 = vmatpush2.msra.mxu0 0.0
      %877 = vmatprep.subr.mxu0 0.0
      %878 = vmatpush2.msra.mxu0 0.0
      %879 = vmatprep.subr.mxu0 0.0
      %880 = vmatpush2.msra.mxu0 0.0
      %881 = vmatprep.subr.mxu0 0.0
      %882 = vmatpush2.msra.mxu0 0.0
      %883 = vmatprep.subr.mxu0 0.0
      %884 = vmatpush2.msra.mxu0 0.0
      %885 = vmatprep.subr.mxu0 0.0
      %886 = vmatpush2.msra.mxu0 0.0
      %887 = vmatprep.subr.mxu0 0.0
      %888 = vmatpush2.msra.mxu0 0.0
      %889 = vmatprep.subr.mxu0 0.0
      %890 = vmatpush2.msra.mxu0 0.0
      %891 = vmatprep.subr.mxu0 0.0
      %892 = vmatpush2.msra.mxu0 0.0
      %893 = vmatprep.subr.mxu0 0.0
      %894 = vmatpush2.msra.mxu0 0.0
      %895 = vmatprep.subr.mxu0 0.0
      %896 = vmatpush2.msra.mxu0 0.0
      %897 = vmatprep.subr.mxu0 0.0
      %898 = vmatpush2.msra.mxu0 0.0
      %899 = vmatprep.subr.mxu0 0.0
      %900 = vmatpush2.msra.mxu0 0.0
      %901 = vmatprep.subr.mxu0 0.0
      %902 = vmatpush2.msra.mxu0 0.0
      %903 = vmatprep.mubr.f32.mxu0 0.0
      %904 = vmatmul.mubr.f32.gmra.mxu0 %v825
      %v905 = vpop.f32.mrf.mxu0
      %v906 = vadd.f32 0.0, %v905
      %v907 = vpop.f32.mrf.mxu0
      %908 = vmatprep.mubr.f32.mxu0 0.0
      %909 = vmatmul.mubr.f32.gmra.mxu0 %v828
      %v910 = vpop.f32.mrf.mxu0
      %v911 = vadd.f32 0.0, %v910
      %v912 = vpop.f32.mrf.mxu0
      %913 = vmatprep.mubr.f32.mxu0 0.0
      %914 = vmatmul.mubr.f32.gmra.mxu0 %v831
      %v915 = vpop.f32.mrf.mxu0
      %v916 = vadd.f32 0.0, %v915
      %v917 = vpop.f32.mrf.mxu0
      %918 = vmatprep.mubr.f32.mxu0 0.0
      %919 = vmatmul.mubr.f32.gmra.mxu0 %v834
      %v920 = vpop.f32.mrf.mxu0
      %v921 = vadd.f32 0.0, %v920
      %v922 = vpop.f32.mrf.mxu0
      %923 = vmatprep.mubr.f32.mxu0 0.0
      %924 = vmatmul.mubr.f32.gmra.mxu0 %v837
      %v925 = vpop.f32.mrf.mxu0
      %v926 = vadd.f32 0.0, %v925
      %v927 = vpop.f32.mrf.mxu0
      %928 = vdwg.mxu0
      %v930 = vsel %vm277, %v906, 0
      %v933 = vsel %vm277, %v911, 0
      %v936 = vsel %vm277, %v916, 0
      %v939 = vsel %vm277, %v921, 0
      %v942 = vsel %vm277, %v926, 0
      %944 = vmatprep.subr.mxu0 0.0
      %945 = vmatpush1.msra.mxu0 0.0
      %946 = vmatprep.subr.mxu0 0.0
      %947 = vmatpush1.msra.mxu0 0.0
      %948 = vmatprep.subr.mxu0 0.0
      %949 = vmatpush1.msra.mxu0 0.0
      %950 = vmatprep.subr.mxu0 0.0
      %951 = vmatpush1.msra.mxu0 0.0
      %952 = vmatprep.subr.mxu0 0.0
      %953 = vmatpush1.msra.mxu0 0.0
      %954 = vmatprep.subr.mxu0 0.0
      %955 = vmatpush1.msra.mxu0 0.0
      %956 = vmatprep.subr.mxu0 0.0
      %957 = vmatpush1.msra.mxu0 0.0
      %958 = vmatprep.subr.mxu0 0.0
      %959 = vmatpush1.msra.mxu0 0.0
      %960 = vmatprep.subr.mxu0 0.0
      %961 = vmatpush1.msra.mxu0 0.0
      %962 = vmatprep.subr.mxu0 0.0
      %963 = vmatpush1.msra.mxu0 0.0
      %964 = vmatprep.subr.mxu0 0.0
      %965 = vmatpush1.msra.mxu0 0.0
      %966 = vmatprep.subr.mxu0 0.0
      %967 = vmatpush1.msra.mxu0 %v256
      %968 = vmatprep.subr.mxu0 0.0
      %969 = vmatpush1.msra.mxu0 %v255
      %970 = vmatprep.subr.mxu0 0.0
      %971 = vmatpush1.msra.mxu0 %v254
      %972 = vmatprep.subr.mxu0 0.0
      %973 = vmatpush1.msra.mxu0 %v253
      %974 = vmatprep.subr.mxu0 0.0
      %975 = vmatpush1.msra.mxu0 %v252
      %976 = vmatprep.subr.mxu0 0.0
      %977 = vmatpush2.msra.mxu0 0.0
      %978 = vmatprep.subr.mxu0 0.0
      %979 = vmatpush2.msra.mxu0 0.0
      %980 = vmatprep.subr.mxu0 0.0
      %981 = vmatpush2.msra.mxu0 0.0
      %982 = vmatprep.subr.mxu0 0.0
      %983 = vmatpush2.msra.mxu0 0.0
      %984 = vmatprep.subr.mxu0 0.0
      %985 = vmatpush2.msra.mxu0 0.0
      %986 = vmatprep.subr.mxu0 0.0
      %987 = vmatpush2.msra.mxu0 0.0
      %988 = vmatprep.subr.mxu0 0.0
      %989 = vmatpush2.msra.mxu0 0.0
      %990 = vmatprep.subr.mxu0 0.0
      %991 = vmatpush2.msra.mxu0 0.0
      %992 = vmatprep.subr.mxu0 0.0
      %993 = vmatpush2.msra.mxu0 0.0
      %994 = vmatprep.subr.mxu0 0.0
      %995 = vmatpush2.msra.mxu0 0.0
      %996 = vmatprep.subr.mxu0 0.0
      %997 = vmatpush2.msra.mxu0 0.0
      %998 = vmatprep.subr.mxu0 0.0
      %999 = vmatpush2.msra.mxu0 0.0
      %1000 = vmatprep.subr.mxu0 0.0
      %1001 = vmatpush2.msra.mxu0 0.0
      %1002 = vmatprep.subr.mxu0 0.0
      %1003 = vmatpush2.msra.mxu0 0.0
      %1004 = vmatprep.subr.mxu0 0.0
      %1005 = vmatpush2.msra.mxu0 0.0
      %1006 = vmatprep.subr.mxu0 0.0
      %1007 = vmatpush2.msra.mxu0 0.0
      %1008 = vmatprep.mubr.f32.mxu0 0.0
      %1009 = vmatmul.mubr.f32.gmra.mxu0 %v930
      %v1010 = vpop.f32.mrf.mxu0
      %v1011 = vadd.f32 0.0, %v1010
      %v1012 = vpop.f32.mrf.mxu0
      %1013 = vmatprep.mubr.f32.mxu0 0.0
      %1014 = vmatmul.mubr.f32.gmra.mxu0 %v933
      %v1015 = vpop.f32.mrf.mxu0
      %v1016 = vadd.f32 0.0, %v1015
      %v1017 = vpop.f32.mrf.mxu0
      %1018 = vmatprep.mubr.f32.mxu0 0.0
      %1019 = vmatmul.mubr.f32.gmra.mxu0 %v936
      %v1020 = vpop.f32.mrf.mxu0
      %v1021 = vadd.f32 0.0, %v1020
      %v1022 = vpop.f32.mrf.mxu0
      %1023 = vmatprep.mubr.f32.mxu0 0.0
      %1024 = vmatmul.mubr.f32.gmra.mxu0 %v939
      %v1025 = vpop.f32.mrf.mxu0
      %v1026 = vadd.f32 0.0, %v1025
      %v1027 = vpop.f32.mrf.mxu0
      %1028 = vmatprep.mubr.f32.mxu0 0.0
      %1029 = vmatmul.mubr.f32.gmra.mxu0 %v942
      %v1030 = vpop.f32.mrf.mxu0
      %v1031 = vadd.f32 0.0, %v1030
      %v1032 = vpop.f32.mrf.mxu0
      %1033 = vdwg.mxu0
      %v1035 = vsel %vm593, %v705, 0
      %v1038 = vsel %vm593, %v707, 0
      %v1041 = vsel %vm593, %v709, 0
      %v1044 = vsel %vm593, %v711, 0
      %v1047 = vsel %vm593, %v713, 0
      %1049 = vmatprep.subr.mxu0 0.0
      %1050 = vmatpush1.msra.mxu0 %v1011
      %1051 = vmatprep.subr.mxu0 0.0
      %1052 = vmatpush1.msra.mxu0 %v926
      %1053 = vmatprep.subr.mxu0 0.0
      %1054 = vmatpush1.msra.mxu0 %v921
      %1055 = vmatprep.subr.mxu0 0.0
      %1056 = vmatpush1.msra.mxu0 %v916
      %1057 = vmatprep.subr.mxu0 0.0
      %1058 = vmatpush1.msra.mxu0 %v911
      %1059 = vmatprep.subr.mxu0 0.0
      %1060 = vmatpush1.msra.mxu0 %v906
      %1061 = vmatprep.subr.mxu0 0.0
      %1062 = vmatpush1.msra.mxu0 %v821
      %1063 = vmatprep.subr.mxu0 0.0
      %1064 = vmatpush1.msra.mxu0 %v816
      %1065 = vmatprep.subr.mxu0 0.0
      %1066 = vmatpush1.msra.mxu0 %v811
      %1067 = vmatprep.subr.mxu0 0.0
      %1068 = vmatpush1.msra.mxu0 %v806
      %1069 = vmatprep.subr.mxu0 0.0
      %1070 = vmatpush1.msra.mxu0 %v801
      %1071 = vmatprep.subr.mxu0 0.0
      %1072 = vmatpush1.msra.mxu0 %v703
      %1073 = vmatprep.subr.mxu0 0.0
      %1074 = vmatpush1.msra.mxu0 %v702
      %1075 = vmatprep.subr.mxu0 0.0
      %1076 = vmatpush1.msra.mxu0 %v701
      %1077 = vmatprep.subr.mxu0 0.0
      %1078 = vmatpush1.msra.mxu0 %v700
      %1079 = vmatprep.subr.mxu0 0.0
      %1080 = vmatpush1.msra.mxu0 %v699
      %1081 = vmatprep.subr.mxu0 0.0
      %1082 = vmatpush2.msra.mxu0 0.0
      %1083 = vmatprep.subr.mxu0 0.0
      %1084 = vmatpush2.msra.mxu0 0.0
      %1085 = vmatprep.subr.mxu0 0.0
      %1086 = vmatpush2.msra.mxu0 0.0
      %1087 = vmatprep.subr.mxu0 0.0
      %1088 = vmatpush2.msra.mxu0 0.0
      %1089 = vmatprep.subr.mxu0 0.0
      %1090 = vmatpush2.msra.mxu0 0.0
      %1091 = vmatprep.subr.mxu0 0.0
      %1092 = vmatpush2.msra.mxu0 0.0
      %1093 = vmatprep.subr.mxu0 0.0
      %1094 = vmatpush2.msra.mxu0 0.0
      %1095 = vmatprep.subr.mxu0 0.0
      %1096 = vmatpush2.msra.mxu0 0.0
      %1097 = vmatprep.subr.mxu0 0.0
      %1098 = vmatpush2.msra.mxu0 0.0
      %1099 = vmatprep.subr.mxu0 0.0
      %1100 = vmatpush2.msra.mxu0 0.0
      %1101 = vmatprep.subr.mxu0 0.0
      %1102 = vmatpush2.msra.mxu0 0.0
      %1103 = vmatprep.subr.mxu0 0.0
      %1104 = vmatpush2.msra.mxu0 0.0
      %1105 = vmatprep.subr.mxu0 0.0
      %1106 = vmatpush2.msra.mxu0 %v1031
      %1107 = vmatprep.subr.mxu0 0.0
      %1108 = vmatpush2.msra.mxu0 %v1026
      %1109 = vmatprep.subr.mxu0 0.0
      %1110 = vmatpush2.msra.mxu0 %v1021
      %1111 = vmatprep.subr.mxu0 0.0
      %1112 = vmatpush2.msra.mxu0 %v1016
      %1113 = vmatprep.mubr.f32.mxu0 %v1035
      %1114 = vmatmul.mubr.f32.gmra.mxu0 %v704
      %v1115 = vpop.f32.mrf.mxu0
      %v1116 = vadd.f32 %v714, %v1115
      %v1117 = vpop.f32.mrf.mxu0
      %1118 = vmatprep.mubr.f32.mxu0 %v1038
      %1119 = vmatmul.mubr.f32.gmra.mxu0 %v706
      %v1120 = vpop.f32.mrf.mxu0
      %v1121 = vadd.f32 %v715, %v1120
      %v1122 = vpop.f32.mrf.mxu0
      %1123 = vmatprep.mubr.f32.mxu0 %v1041
      %1124 = vmatmul.mubr.f32.gmra.mxu0 %v708
      %v1125 = vpop.f32.mrf.mxu0
      %v1126 = vadd.f32 %v716, %v1125
      %v1127 = vpop.f32.mrf.mxu0
      %1128 = vmatprep.mubr.f32.mxu0 %v1044
      %1129 = vmatmul.mubr.f32.gmra.mxu0 %v710
      %v1130 = vpop.f32.mrf.mxu0
      %v1131 = vadd.f32 %v717, %v1130
      %v1132 = vpop.f32.mrf.mxu0
      %1133 = vmatprep.mubr.f32.mxu0 %v1047
      %1134 = vmatmul.mubr.f32.gmra.mxu0 %v712
      %v1135 = vpop.f32.mrf.mxu0
      %v1136 = vadd.f32 %v718, %v1135
      %v1137 = vpop.f32.mrf.mxu0
      %1138 = vdwg.mxu0
      %1139 = vst.msk [vmem:[%s251] sm:$0xff] %vm277, %v1116
      %1140 = vst.msk [vmem:[%s251 + $0x8] sm:$0xff] %vm277, %v1121
      %1141 = vst.msk [vmem:[%s251 + $0x10] sm:$0xff] %vm277, %v1126
      %1142 = vst.msk [vmem:[%s251 + $0x18] sm:$0xff] %vm277, %v1131
      %1143 = vst.msk [vmem:[%s251 + $0x20] sm:$0xff] %vm277, %v1136
      %p1144 = scmp.lt.s32.totalorder %s17, 7
      %s1145 = scalar_select %p1144, %s17, 7
      %s1146 = smul.addr %s1145, 5
      %s1147 = smul.addr %s1146, 8
      %s1148 = scalar_lea.vmem %s6, %s1147
      // Predicated region
      $region45: #{tagconv_encoder_batched.1} parent=43 // pred_check
        %p1149 = pneg %p166
      $region46: #{tagconv_encoder_batched.1} parent=43 // pred_check_branch
        %1151 = sbr.rel (%p1149) target = $region48
      $region47: #{tagconv_encoder_batched.1} parent=43 // pred_region
        _
      $region48: #{tagconv_encoder_batched.1} parent=43 // pred_fallthru
        _
    $region44: #{tagconv_encoder_batched.1} parent=5 // pred_fallthru
      _
    %p1152 = scmp.le.s32.totalorder 2, %s12
    // Predicated region
    $region49: #{tagconv_encoder_batched.1} parent=5 // pred_check
      %p1153 = pneg %p1152
    $region50: #{tagconv_encoder_batched.1} parent=5 // pred_check_branch
      %1155 = sbr.rel (%p1153) target = $region52
    $region51: #{tagconv_encoder_batched.1} parent=5 // pred_region
      %s1156 = ssub.s32 %s12, 2
      // Predicated region
      $region53: #{tagconv_encoder_batched.1} parent=51 // pred_check
        %p1157 = pneg %p172
      $region54: #{tagconv_encoder_batched.1} parent=51 // pred_check_branch
        %1159 = sbr.rel (%p1157) target = $region56
      $region55: #{tagconv_encoder_batched.1} parent=51 // pred_region
        %p1160 = scmp.lt.s32.totalorder %s18, 7
        %s1161 = scalar_select %p1160, %s18, 7
        %s1162 = smul.addr %s1161, 5
        %s1163 = smul.addr %s1162, 8
        %s1164 = scalar_lea.vmem %s6, %s1163
      $region56: #{tagconv_encoder_batched.1} parent=51 // pred_fallthru
        _
    $region52: #{tagconv_encoder_batched.1} parent=5 // pred_fallthru
      _
  $region6: #{tagconv_encoder_batched.1} parent=0 // loop_footer
    %s16 = sadd.s32 1, %s12
  $region7: #{tagconv_encoder_batched.1} parent=0 // loop_footer_branch
    %11 = sbr.rel target = $region3
  $region8: #{tagconv_encoder_batched.1} parent=0 // loop_exit
    _

</llo_original>
